<compile_context>
chip_gen: v7x
topology: tpu7x:2x2x1
jax: 0.10.0
libtpu: 0.0.40
codegen_flags: <defaults>
</compile_context>

<pallas_src>
import jax
import jax.numpy as jnp
from jax.experimental import pallas as pl
from jax.experimental.pallas import tpu as pltpu

HIDDEN_SIZE = 32
LANE = 128          # TPU lane width: pad feature dims -> unmasked vector stores
NEG_INF = -1e30     # fills padded logit lanes so log_softmax ignores them


def rnn_seq_kernel(x_ref, h0_ref, wxh_ref, whh_ref, bh_ref,
                   wxo_ref, who_ref, bo_ref,
                   out_ref, hid_ref, h_scr):
    """One recurrent step per grid iteration; hidden state stays in VMEM."""
    t = pl.program_id(0)

    @pl.when(t == 0)
    def _init():
        h_scr[...] = h0_ref[...]

    x = x_ref[0]                 # [B, input_size]
    h = h_scr[...]               # [B, H_PAD]  (previous hidden, VMEM-resident)

    # output = log_softmax(i2o_1(i2o(cat(x, h))))  -- i2o∘i2o_1 pre-fused.
    logits = (jnp.dot(x, wxo_ref[...], preferred_element_type=jnp.float32)
              + jnp.dot(h, who_ref[...], preferred_element_type=jnp.float32)
              + bo_ref[...])
    m = jnp.max(logits, axis=1, keepdims=True)
    shifted = logits - m
    lse = jnp.log(jnp.sum(jnp.exp(shifted), axis=1, keepdims=True))
    out_ref[0] = (shifted - lse).astype(out_ref.dtype)

    # hidden = i2h(cat(x, h)) -- uses the OLD hidden, like the PyTorch forward.
    new_h = (jnp.dot(x, wxh_ref[...], preferred_element_type=jnp.float32)
             + jnp.dot(h, whh_ref[...], preferred_element_type=jnp.float32)
             + bh_ref[...])
    h_scr[...] = new_h

    @pl.when(t == pl.num_programs(0) - 1)
    def _finalize():
        hid_ref[...] = new_h.astype(hid_ref.dtype)


def prepare_params(params, input_size, output_size):
    """One-time parameter prep (hoisted out of the per-call / per-step path)."""
    (w_i2h, b_i2h), (w_i2o, b_i2o), (w_i2o1, b_i2o1) = params

    # Algebraically fuse i2o_1 ∘ i2o (exact up to f32 rounding).
    w_fused = w_i2o1 @ w_i2o                     # [output_size, input_size + H]
    b_fused = w_i2o1 @ b_i2o + b_i2o1            # [output_size]

    h_pad = LANE
    o_pad = -(-output_size // LANE) * LANE

    def split_t(w):  # [out, in+H] -> x-half [in, out], h-half [H, out]
        return w[:, :input_size].T, w[:, input_size:].T

    wxh, whh = split_t(w_i2h)
    wxo, who = split_t(w_fused)

    W_xh = jnp.zeros((input_size, h_pad), jnp.float32).at[:, :HIDDEN_SIZE].set(wxh)
    W_hh = jnp.zeros((h_pad, h_pad), jnp.float32).at[:HIDDEN_SIZE, :HIDDEN_SIZE].set(whh)
    B_h = jnp.zeros((1, h_pad), jnp.float32).at[0, :HIDDEN_SIZE].set(b_i2h)
    W_xo = jnp.zeros((input_size, o_pad), jnp.float32).at[:, :output_size].set(wxo)
    W_ho = jnp.zeros((h_pad, o_pad), jnp.float32).at[:HIDDEN_SIZE, :output_size].set(who)
    B_o = jnp.full((1, o_pad), NEG_INF, jnp.float32).at[0, :output_size].set(b_fused)

    return dict(W_xh=W_xh, W_hh=W_hh, B_h=B_h, W_xo=W_xo, W_ho=W_ho, B_o=B_o,
                input_size=input_size, output_size=output_size,
                h_pad=h_pad, o_pad=o_pad)


def rnn_sequence_forward(xs, h0, prepped):
    """Run T recurrent steps inside one pallas_call.

    xs: [T, B, input_size], h0: [B, HIDDEN_SIZE]
    returns (log_probs [T, B, output_size], final_hidden [B, HIDDEN_SIZE]).
    """
    T, B, in_sz = xs.shape
    h_pad, o_pad = prepped["h_pad"], prepped["o_pad"]
    out_sz = prepped["output_size"]

    h0_pad = jnp.zeros((B, h_pad), jnp.float32).at[:, :HIDDEN_SIZE].set(h0)

    def whole(a):  # constant index_map -> fetched once, VMEM-resident for all T
        return pl.BlockSpec(a.shape, lambda t: (0, 0))

    W_xh, W_hh, B_h = prepped["W_xh"], prepped["W_hh"], prepped["B_h"]
    W_xo, W_ho, B_o = prepped["W_xo"], prepped["W_ho"], prepped["B_o"]

    out_seq, hid = pl.pallas_call(
        rnn_seq_kernel,
        out_shape=(jax.ShapeDtypeStruct((T, B, o_pad), jnp.float32),
                   jax.ShapeDtypeStruct((B, h_pad), jnp.float32)),
        grid_spec=pltpu.PrefetchScalarGridSpec(
            num_scalar_prefetch=0,
            grid=(T,),
            in_specs=[
                pl.BlockSpec((1, B, in_sz), lambda t: (t, 0, 0)),  # x_t streamed
                whole(h0_pad),
                whole(W_xh), whole(W_hh), whole(B_h),
                whole(W_xo), whole(W_ho), whole(B_o),
            ],
            out_specs=(
                pl.BlockSpec((1, B, o_pad), lambda t: (t, 0, 0)),
                pl.BlockSpec((B, h_pad), lambda t: (0, 0)),
            ),
            scratch_shapes=[pltpu.VMEM((B, h_pad), jnp.float32)],
        ),
        compiler_params=pltpu.CompilerParams(
            dimension_semantics=("arbitrary",)),   # recurrence over time
    )(xs, h0_pad, W_xh, W_hh, B_h, W_xo, W_ho, B_o)

    return out_seq[:, :, :out_sz], hid[:, :HIDDEN_SIZE]


def rnn_forward(x, hidden, prepped):
    """Single step == the PyTorch module's forward(input, hidden)."""
    out_seq, new_hidden = rnn_sequence_forward(x[None], hidden, prepped)
    return out_seq[0], new_hidden


def init_linear(key, out_features, in_features):
    """Deterministic nn.Linear-style init: U(-1/sqrt(in), 1/sqrt(in))."""
    kw, kb = jax.random.split(key)
    bound = 1.0 / jnp.sqrt(jnp.float32(in_features))
    w = jax.random.uniform(kw, (out_features, in_features),
                           jnp.float32, -bound, bound)
    b = jax.random.uniform(kb, (out_features,), jnp.float32, -bound, bound)
    return w, b


if __name__ == "__main__":
    batch = 2
    input_size = 16
    output_size = 16
    seq_len = 8

    key = jax.random.PRNGKey(0)
    k_i2h, k_i2o, k_i2o1, kx, kh = jax.random.split(key, 5)

    params = (
        init_linear(k_i2h, HIDDEN_SIZE, input_size + HIDDEN_SIZE),   # i2h
        init_linear(k_i2o, HIDDEN_SIZE, input_size + HIDDEN_SIZE),   # i2o
        init_linear(k_i2o1, output_size, HIDDEN_SIZE),               # i2o_1
    )
    prepped = prepare_params(params, input_size, output_size)

    xs = jax.random.normal(kx, (seq_len, batch, input_size), jnp.float32)
    h0 = jnp.zeros((batch, HIDDEN_SIZE), jnp.float32)                # initHidden

    # Fused multi-step call (whole recurrence inside one pallas_call).
    outs, h_final = rnn_sequence_forward(xs, h0, prepped)
    # Single-step call (exact module forward semantics).
    out0, h1 = rnn_forward(xs[0], h0, prepped)
    jax.block_until_ready((outs, h_final, out0, h1))

    # Plain-JAX reference (unfused weights, concat form — matches PyTorch).
    (w_i2h, b_i2h), (w_i2o, b_i2o), (w_i2o1, b_i2o1) = params

    def ref_step(x, h):
        comb = jnp.concatenate([x, h], axis=1)
        new_h = comb @ w_i2h.T + b_i2h
        o = (comb @ w_i2o.T + b_i2o) @ w_i2o1.T + b_i2o1
        return jax.nn.log_softmax(o, axis=1), new_h

    h = h0
    ref_outs = []
    for t in range(seq_len):
        o, h = ref_step(xs[t], h)
        ref_outs.append(o)
    ref_outs = jnp.stack(ref_outs)

    assert jnp.allclose(outs, ref_outs, atol=1e-4), "sequence output mismatch"
    assert jnp.allclose(h_final, h, atol=1e-4), "final hidden mismatch"
    assert jnp.allclose(out0, ref_outs[0], atol=1e-4), "single-step output mismatch"
    ref_h1 = ref_step(xs[0], h0)[1]
    assert jnp.allclose(h1, ref_h1, atol=1e-4), "single-step hidden mismatch"

    print("KERNEL_OK")
</pallas_src>

<mosaic_0001>
module attributes {stable_mosaic.version = 11 : i64} {
  func.func @rnn_seq_kernel(%arg0: i32, %arg1: memref<1x2x16xf32, #tpu.memory_space<vmem>>, %arg2: memref<2x128xf32, #tpu.memory_space<vmem>>, %arg3: memref<16x128xf32, #tpu.memory_space<vmem>>, %arg4: memref<128x128xf32, #tpu.memory_space<vmem>>, %arg5: memref<1x128xf32, #tpu.memory_space<vmem>>, %arg6: memref<16x128xf32, #tpu.memory_space<vmem>>, %arg7: memref<128x128xf32, #tpu.memory_space<vmem>>, %arg8: memref<1x128xf32, #tpu.memory_space<vmem>>, %arg9: memref<1x2x128xf32, #tpu.memory_space<vmem>>, %arg10: memref<2x128xf32, #tpu.memory_space<vmem>>, %arg11: memref<2x128xf32, #tpu.memory_space<vmem>>) attributes {dimension_semantics = [#tpu.dimension_semantics<arbitrary>], iteration_bounds = array<i64: 8>, scalar_prefetch = 0 : i64, scratch_operands = 1 : i64, tpu.core_type = #tpu.core_type<tc>, window_params = [{transform_indices = @transform_0, window_bounds = array<i64: 1, 2, 16>}, {pipeline_mode = #tpu.pipeline_mode<synchronous>, transform_indices = @transform_1, window_bounds = array<i64: 2, 128>}, {pipeline_mode = #tpu.pipeline_mode<synchronous>, transform_indices = @transform_2, window_bounds = array<i64: 16, 128>}, {pipeline_mode = #tpu.pipeline_mode<synchronous>, transform_indices = @transform_3, window_bounds = array<i64: 128, 128>}, {pipeline_mode = #tpu.pipeline_mode<synchronous>, transform_indices = @transform_4, window_bounds = array<i64: 1, 128>}, {pipeline_mode = #tpu.pipeline_mode<synchronous>, transform_indices = @transform_5, window_bounds = array<i64: 16, 128>}, {pipeline_mode = #tpu.pipeline_mode<synchronous>, transform_indices = @transform_6, window_bounds = array<i64: 128, 128>}, {pipeline_mode = #tpu.pipeline_mode<synchronous>, transform_indices = @transform_7, window_bounds = array<i64: 1, 128>}, {transform_indices = @transform_8, window_bounds = array<i64: 1, 2, 128>}, {pipeline_mode = #tpu.pipeline_mode<synchronous>, transform_indices = @transform_9, window_bounds = array<i64: 2, 128>}]} {
    %c0_i32 = arith.constant 0 : i32
    %0 = arith.cmpi eq, %arg0, %c0_i32 : i32
    %1 = arith.extui %0 : i1 to i32
    %c0_i32_0 = arith.constant 0 : i32
    %2 = arith.cmpi ne, %1, %c0_i32_0 : i32
    scf.if %2 {
      %c0_28 = arith.constant 0 : index
      %c0_29 = arith.constant 0 : index
      %39 = vector.load %arg2[%c0_28, %c0_29] : memref<2x128xf32, #tpu.memory_space<vmem>>, vector<2x128xf32>
      %c0_30 = arith.constant 0 : index
      %c0_31 = arith.constant 0 : index
      %40 = vector.load %arg11[%c0_30, %c0_31] : memref<2x128xf32, #tpu.memory_space<vmem>>, vector<2x128xf32>
      tpu.vector_store %arg11[%c0_30, %c0_31], %39 {strides = array<i32>} : memref<2x128xf32, #tpu.memory_space<vmem>>, vector<2x128xf32>,
    } else {
    }
    %c0 = arith.constant 0 : index
    %c0_1 = arith.constant 0 : index
    %c0_2 = arith.constant 0 : index
    %3 = vector.load %arg1[%c0, %c0_1, %c0_2] : memref<1x2x16xf32, #tpu.memory_space<vmem>>, vector<1x2x16xf32>
    %4 = vector.shape_cast %3 : vector<1x2x16xf32> to vector<2x16xf32>
    %c0_3 = arith.constant 0 : index
    %c0_4 = arith.constant 0 : index
    %5 = vector.load %arg11[%c0_3, %c0_4] : memref<2x128xf32, #tpu.memory_space<vmem>>, vector<2x128xf32>
    %c0_5 = arith.constant 0 : index
    %c0_6 = arith.constant 0 : index
    %6 = vector.load %arg6[%c0_5, %c0_6] : memref<16x128xf32, #tpu.memory_space<vmem>>, vector<16x128xf32>
    %cst = arith.constant dense<0.000000e+00> : vector<2x128xf32>
    %7 = tpu.matmul %4, %6, %cst {dimension_numbers = #tpu.dot_dimension_numbers<[1], [0], [0], [1], [0, 0, 1, 1], [], []>} : vector<2x16xf32>, vector<16x128xf32>, vector<2x128xf32> -> vector<2x128xf32>
    %c0_7 = arith.constant 0 : index
    %c0_8 = arith.constant 0 : index
    %8 = vector.load %arg7[%c0_7, %c0_8] : memref<128x128xf32, #tpu.memory_space<vmem>>, vector<128x128xf32>
    %cst_9 = arith.constant dense<0.000000e+00> : vector<2x128xf32>
    %9 = tpu.matmul %5, %8, %cst_9 {dimension_numbers = #tpu.dot_dimension_numbers<[1], [0], [0], [1], [0, 0, 1, 1], [], []>} : vector<2x128xf32>, vector<128x128xf32>, vector<2x128xf32> -> vector<2x128xf32>
    %10 = arith.addf %7, %9 : vector<2x128xf32>
    %c0_10 = arith.constant 0 : index
    %c0_11 = arith.constant 0 : index
    %11 = vector.load %arg8[%c0_10, %c0_11] : memref<1x128xf32, #tpu.memory_space<vmem>>, vector<1x128xf32>
    %12 = vector.broadcast %11 : vector<1x128xf32> to vector<2x128xf32>
    %13 = arith.addf %10, %12 : vector<2x128xf32>
    %cst_12 = arith.constant dense<0xFF800000> : vector<2xf32>
    %14 = vector.multi_reduction <maximumf>, %13, %cst_12 [1] : vector<2x128xf32> to vector<2xf32>
    %15 = vector.shape_cast %14 : vector<2xf32> to vector<2x1xf32>
    %16 = vector.broadcast %15 : vector<2x1xf32> to vector<2x128xf32>
    %17 = arith.subf %13, %16 : vector<2x128xf32>
    %18 = math.exp %17 : vector<2x128xf32>
    %cst_13 = arith.constant dense<0.000000e+00> : vector<2xf32>
    %19 = vector.multi_reduction <add>, %18, %cst_13 [1] : vector<2x128xf32> to vector<2xf32>
    %20 = vector.shape_cast %19 : vector<2xf32> to vector<2x1xf32>
    %21 = math.log %20 : vector<2x1xf32>
    %22 = vector.broadcast %21 : vector<2x1xf32> to vector<2x128xf32>
    %23 = arith.subf %17, %22 : vector<2x128xf32>
    %c0_14 = arith.constant 0 : index
    %c0_15 = arith.constant 0 : index
    %c0_16 = arith.constant 0 : index
    %24 = vector.load %arg9[%c0_14, %c0_15, %c0_16] : memref<1x2x128xf32, #tpu.memory_space<vmem>>, vector<1x2x128xf32>
    %25 = vector.shape_cast %24 : vector<1x2x128xf32> to vector<2x128xf32>
    %26 = vector.shape_cast %23 : vector<2x128xf32> to vector<1x2x128xf32>
    tpu.vector_store %arg9[%c0_14, %c0_15, %c0_16], %26 {strides = array<i32>} : memref<1x2x128xf32, #tpu.memory_space<vmem>>, vector<1x2x128xf32>,
    %c0_17 = arith.constant 0 : index
    %c0_18 = arith.constant 0 : index
    %27 = vector.load %arg3[%c0_17, %c0_18] : memref<16x128xf32, #tpu.memory_space<vmem>>, vector<16x128xf32>
    %cst_19 = arith.constant dense<0.000000e+00> : vector<2x128xf32>
    %28 = tpu.matmul %4, %27, %cst_19 {dimension_numbers = #tpu.dot_dimension_numbers<[1], [0], [0], [1], [0, 0, 1, 1], [], []>} : vector<2x16xf32>, vector<16x128xf32>, vector<2x128xf32> -> vector<2x128xf32>
    %c0_20 = arith.constant 0 : index
    %c0_21 = arith.constant 0 : index
    %29 = vector.load %arg4[%c0_20, %c0_21] : memref<128x128xf32, #tpu.memory_space<vmem>>, vector<128x128xf32>
    %cst_22 = arith.constant dense<0.000000e+00> : vector<2x128xf32>
    %30 = tpu.matmul %5, %29, %cst_22 {dimension_numbers = #tpu.dot_dimension_numbers<[1], [0], [0], [1], [0, 0, 1, 1], [], []>} : vector<2x128xf32>, vector<128x128xf32>, vector<2x128xf32> -> vector<2x128xf32>
    %31 = arith.addf %28, %30 : vector<2x128xf32>
    %c0_23 = arith.constant 0 : index
    %c0_24 = arith.constant 0 : index
    %32 = vector.load %arg5[%c0_23, %c0_24] : memref<1x128xf32, #tpu.memory_space<vmem>>, vector<1x128xf32>
    %33 = vector.broadcast %32 : vector<1x128xf32> to vector<2x128xf32>
    %34 = arith.addf %31, %33 : vector<2x128xf32>
    %c0_25 = arith.constant 0 : index
    %c0_26 = arith.constant 0 : index
    %35 = vector.load %arg11[%c0_25, %c0_26] : memref<2x128xf32, #tpu.memory_space<vmem>>, vector<2x128xf32>
    tpu.vector_store %arg11[%c0_25, %c0_26], %34 {strides = array<i32>} : memref<2x128xf32, #tpu.memory_space<vmem>>, vector<2x128xf32>,
    %c7_i32 = arith.constant 7 : i32
    %36 = arith.cmpi eq, %arg0, %c7_i32 : i32
    %37 = arith.extui %36 : i1 to i32
    %c0_i32_27 = arith.constant 0 : i32
    %38 = arith.cmpi ne, %37, %c0_i32_27 : i32
    scf.if %38 {
      %c0_28 = arith.constant 0 : index
      %c0_29 = arith.constant 0 : index
      %39 = vector.load %arg10[%c0_28, %c0_29] : memref<2x128xf32, #tpu.memory_space<vmem>>, vector<2x128xf32>
      tpu.vector_store %arg10[%c0_28, %c0_29], %34 {strides = array<i32>} : memref<2x128xf32, #tpu.memory_space<vmem>>, vector<2x128xf32>,
    } else {
    }
    return
  }
  func.func @transform_0(%arg0: i32) -> (i32, i32, i32) {
    %c0_i32 = arith.constant 0 : i32
    %c0_i32_0 = arith.constant 0 : i32
    %c0_i32_1 = arith.constant 0 : i32
    return %arg0, %c0_i32, %c0_i32_0 : i32, i32, i32
  }
  func.func @transform_1(%arg0: i32) -> (i32, i32) {
    %c0_i32 = arith.constant 0 : i32
    %c0_i32_0 = arith.constant 0 : i32
    %c0_i32_1 = arith.constant 0 : i32
    return %c0_i32, %c0_i32_0 : i32, i32
  }
  func.func @transform_2(%arg0: i32) -> (i32, i32) {
    %c0_i32 = arith.constant 0 : i32
    %c0_i32_0 = arith.constant 0 : i32
    %c0_i32_1 = arith.constant 0 : i32
    return %c0_i32, %c0_i32_0 : i32, i32
  }
  func.func @transform_3(%arg0: i32) -> (i32, i32) {
    %c0_i32 = arith.constant 0 : i32
    %c0_i32_0 = arith.constant 0 : i32
    %c0_i32_1 = arith.constant 0 : i32
    return %c0_i32, %c0_i32_0 : i32, i32
  }
  func.func @transform_4(%arg0: i32) -> (i32, i32) {
    %c0_i32 = arith.constant 0 : i32
    %c0_i32_0 = arith.constant 0 : i32
    %c0_i32_1 = arith.constant 0 : i32
    return %c0_i32, %c0_i32_0 : i32, i32
  }
  func.func @transform_5(%arg0: i32) -> (i32, i32) {
    %c0_i32 = arith.constant 0 : i32
    %c0_i32_0 = arith.constant 0 : i32
    %c0_i32_1 = arith.constant 0 : i32
    return %c0_i32, %c0_i32_0 : i32, i32
  }
  func.func @transform_6(%arg0: i32) -> (i32, i32) {
    %c0_i32 = arith.constant 0 : i32
    %c0_i32_0 = arith.constant 0 : i32
    %c0_i32_1 = arith.constant 0 : i32
    return %c0_i32, %c0_i32_0 : i32, i32
  }
  func.func @transform_7(%arg0: i32) -> (i32, i32) {
    %c0_i32 = arith.constant 0 : i32
    %c0_i32_0 = arith.constant 0 : i32
    %c0_i32_1 = arith.constant 0 : i32
    return %c0_i32, %c0_i32_0 : i32, i32
  }
  func.func @transform_8(%arg0: i32) -> (i32, i32, i32) {
    %c0_i32 = arith.constant 0 : i32
    %c0_i32_0 = arith.constant 0 : i32
    %c0_i32_1 = arith.constant 0 : i32
    return %arg0, %c0_i32, %c0_i32_0 : i32, i32, i32
  }
  func.func @transform_9(%arg0: i32) -> (i32, i32) {
    %c0_i32 = arith.constant 0 : i32
    %c0_i32_0 = arith.constant 0 : i32
    %c0_i32_1 = arith.constant 0 : i32
    return %c0_i32, %c0_i32_0 : i32, i32
  }
}

</mosaic_0001>

<llo_original>
// kernel: tpu_custom_call.1
$region0: #{tpu_custom_call.1}
  #allocation0 [shape = 'u32[]', space=smem, size = 0x4, offset = 0x4, fixed_abs, tag = 'smem constant byte address 0x4 - core index']
  #allocation1 [shape = 'u32[144,128]{1,0:T(1,128)}', space=vmem, size = 0x12000, scoped, tag = 'internal scratch']
  #allocation2 [shape = 'f32[2,128]{1,0:T(2,128)}', space=vmem, size = 0x400, scoped, tag = 'scratch operand']
  %s0 = inlined_call_operand.hbm [shape: f32[8,2,16], index: 0, kind: input, shape index: {}]
  %s1 = inlined_call_operand.vmem [shape: f32[2,128], index: 1, kind: input, shape index: {}]
  %s2 = inlined_call_operand.hbm [shape: f32[16,128], index: 2, kind: input, shape index: {}]
  %s3 = inlined_call_operand.hbm [shape: f32[128,128], index: 3, kind: input, shape index: {}]
  %s4 = inlined_call_operand.hbm [shape: f32[1,128], index: 4, kind: input, shape index: {}]
  %s5 = inlined_call_operand.vmem [shape: f32[16,128], index: 5, kind: input, shape index: {}]
  %s6 = inlined_call_operand.hbm [shape: f32[128,128], index: 6, kind: input, shape index: {}]
  %s7 = inlined_call_operand.vmem [shape: f32[1,128], index: 7, kind: input, shape index: {}]
  %s8 = inlined_call_operand.hbm [shape: f32[8,2,128], index: 8, kind: output, shape index: {0}]
  %s9 = inlined_call_operand.hbm [shape: f32[2,128], index: 9, kind: output, shape index: {1}]
  %10 = xla_tuple %s8, %s9
  %s11 = sld [smem:[#allocation0]]
  $region101: #{tpu_custom_call.1} parent=0
    _
  %s13 = ssub.s32 1, %s11
  %s14 = scalar_select 0, %s13, %s11
  $region1: #{tpu_custom_call.1} parent=0
    #allocation3 [shape = 'u8[2048]{0}', space=vmem, size = 0x800, scoped, tag = 'input window, operand 0']
    #allocation4 [shape = 's32[2]{0}', space=sflag, size = 0x8, scoped, tag = 'scoped memory for tpu_custom_call.1']
    #allocation5 [shape = 's32[2]{0}', space=sflag, size = 0x8, scoped, tag = 'scoped memory for tpu_custom_call.1']
    #allocation6 [shape = 'u8[8192]{0}', space=vmem, size = 0x2000, scoped, tag = 'input window, operand 2, single buffered']
    #allocation7 [shape = 's32[1]{0}', space=sflag, size = 0x4, scoped, tag = 'scoped memory for tpu_custom_call.1']
    #allocation8 [shape = 'u8[65536]{0}', space=vmem, size = 0x10000, scoped, tag = 'input window, operand 3, single buffered']
    #allocation9 [shape = 'u8[512]{0}', space=vmem, size = 0x400, scoped, tag = 'input window, operand 4, single buffered']
    #allocation10 [shape = 's32[1]{0}', space=sflag, size = 0x4, scoped, tag = 'scoped memory for tpu_custom_call.1']
    #allocation11 [shape = 'u8[65536]{0}', space=vmem, size = 0x10000, scoped, tag = 'input window, operand 6, single buffered']
    #allocation12 [shape = 'u8[2048]{0}', space=vmem, size = 0x800, scoped, tag = 'output window, operand 0']
    #allocation13 [shape = 'u8[1024]{0}', space=vmem, size = 0x400, scoped, tag = 'output window, operand 1, single buffered']
    #allocation14 [shape = 's32[1]{0}', space=sflag, size = 0x4, scoped, tag = 'scoped memory for tpu_custom_call.1']
    %15 = vsyncpa [#allocation4], 0
    %s16 = scalar_lea.sflag [#allocation4], 1
    %17 = vsyncpa %s16, 0
    %18 = vsyncpa [#allocation7], 0
    %19 = vsyncpa [#allocation10], 0
    %20 = vsyncpa [#allocation5], 0
    %s21 = scalar_lea.sflag [#allocation5], 1
    %22 = vsyncpa %s21, 0
    %23 = vsyncpa [#allocation14], 0
    loop: start=0, step=1, limit=10
    $region2: #{tpu_custom_call.1} parent=1 // loop_pre_header
      _
    $region3: #{tpu_custom_call.1} parent=1 // loop_header
      %s25 = sphi 0, %s29
      %p26 = scmp.ge.s32.totalorder %s25, 10
      %s35 = sphi 0, %s37
      %s38 = sphi 0, %s35
      %s39 = sphi 0, %s38
      %s55 = sphi 0, %s39
      %s59 = sphi 0, %s59
      %s61 = sphi 0, %s59
      %s62 = sphi 0, %s61
      %s76 = sphi 0, %s62
      %s80 = sphi 0, %s80
      %s82 = sphi 0, %s80
      %s83 = sphi 0, %s82
      %s97 = sphi 0, %s83
      %s101 = sphi 0, %s101
      %s103 = sphi 0, %s101
      %s104 = sphi 0, %s103
      %s118 = sphi 0, %s104
      %s122 = sphi 0, %s122
      %s124 = sphi 0, %s122
      %s125 = sphi 0, %s124
      %s139 = sphi 0, %s125
      %s143 = sphi 0, %s143
      %s145 = sphi 0, %s143
      %s146 = sphi 0, %s145
      %s160 = sphi 0, %s146
      %s164 = sphi 0, %s164
      %s166 = sphi 0, %s164
      %s167 = sphi 0, %s166
      %s181 = sphi 0, %s167
      %s185 = sphi 0, %s185
      %s187 = sphi 0, %s185
      %s188 = sphi 0, %s187
      %s202 = sphi 0, %s188
      %s208 = sphi 0, %s210
      %s211 = sphi 0, %s208
      %s212 = sphi 0, %s211
      %s228 = sphi 0, %s212
      %s232 = sphi 0, %s232
      %s234 = sphi 0, %s232
      %s235 = sphi 0, %s234
      %s249 = sphi 0, %s235
    $region4: #{tpu_custom_call.1} parent=1 // loop_header_branch
      %28 = sbr.rel (%p26) target = $region8
    $region5: #{tpu_custom_call.1} parent=1 // loop_body
      %s30 = ssub.s32 %s25, 1
      %s31 = ssub.s32 %s25, 2
      %s32 = sadd.s32 %s25, 1
      %s33 = ssub.s32 %s25, %s32
      %p34 = scmp.eq.s32.totalorder %s33, 0
      %s36 = sadd.s32 %s35, 1
      %s37 = scalar_select %p34, %s35, %s36
      %p40 = pneg %p34
      %p41 = scmp.eq.s32.totalorder %s25, 7
      %p42 = por %p40, %p41
      %p43 = scmp.ne.s32.totalorder %s35, %s38
      %p44 = scmp.eq.s32.totalorder %s25, 0
      %p45 = por %p43, %p44
      %p46 = scmp.ne.s32.totalorder %s35, %s38
      %p47 = scmp.eq.s32.totalorder %s30, 7
      %p48 = por %p46, %p47
      %p49 = scmp.ne.s32.totalorder %s38, %s39
      %p50 = scmp.eq.s32.totalorder %s30, 0
      %p51 = por %p49, %p50
      %p52 = scmp.ne.s32.totalorder %s38, %s39
      %p53 = scmp.eq.s32.totalorder %s31, 7
      %p54 = por %p52, %p53
      %p56 = scmp.ne.s32.totalorder %s39, %s55
      %p57 = scmp.eq.s32.totalorder %s31, 0
      %p58 = por %p56, %p57
      %s60 = sadd.s32 %s59, 1
      %p63 = scmp.eq.s32.totalorder %s25, 7
      %p64 = scmp.ne.s32.totalorder %s59, %s61
      %p65 = scmp.eq.s32.totalorder %s25, 0
      %p66 = por %p64, %p65
      %p67 = scmp.ne.s32.totalorder %s59, %s61
      %p68 = scmp.eq.s32.totalorder %s30, 7
      %p69 = por %p67, %p68
      %p70 = scmp.ne.s32.totalorder %s61, %s62
      %p71 = scmp.eq.s32.totalorder %s30, 0
      %p72 = por %p70, %p71
      %p73 = scmp.ne.s32.totalorder %s61, %s62
      %p74 = scmp.eq.s32.totalorder %s31, 7
      %p75 = por %p73, %p74
      %p77 = scmp.ne.s32.totalorder %s62, %s76
      %p78 = scmp.eq.s32.totalorder %s31, 0
      %p79 = por %p77, %p78
      %s81 = sadd.s32 %s80, 1
      %p84 = scmp.eq.s32.totalorder %s25, 7
      %p85 = scmp.ne.s32.totalorder %s80, %s82
      %p86 = scmp.eq.s32.totalorder %s25, 0
      %p87 = por %p85, %p86
      %p88 = scmp.ne.s32.totalorder %s80, %s82
      %p89 = scmp.eq.s32.totalorder %s30, 7
      %p90 = por %p88, %p89
      %p91 = scmp.ne.s32.totalorder %s82, %s83
      %p92 = scmp.eq.s32.totalorder %s30, 0
      %p93 = por %p91, %p92
      %p94 = scmp.ne.s32.totalorder %s82, %s83
      %p95 = scmp.eq.s32.totalorder %s31, 7
      %p96 = por %p94, %p95
      %p98 = scmp.ne.s32.totalorder %s83, %s97
      %p99 = scmp.eq.s32.totalorder %s31, 0
      %p100 = por %p98, %p99
      %s102 = sadd.s32 %s101, 1
      %p105 = scmp.eq.s32.totalorder %s25, 7
      %p106 = scmp.ne.s32.totalorder %s101, %s103
      %p107 = scmp.eq.s32.totalorder %s25, 0
      %p108 = por %p106, %p107
      %p109 = scmp.ne.s32.totalorder %s101, %s103
      %p110 = scmp.eq.s32.totalorder %s30, 7
      %p111 = por %p109, %p110
      %p112 = scmp.ne.s32.totalorder %s103, %s104
      %p113 = scmp.eq.s32.totalorder %s30, 0
      %p114 = por %p112, %p113
      %p115 = scmp.ne.s32.totalorder %s103, %s104
      %p116 = scmp.eq.s32.totalorder %s31, 7
      %p117 = por %p115, %p116
      %p119 = scmp.ne.s32.totalorder %s104, %s118
      %p120 = scmp.eq.s32.totalorder %s31, 0
      %p121 = por %p119, %p120
      %s123 = sadd.s32 %s122, 1
      %p126 = scmp.eq.s32.totalorder %s25, 7
      %p127 = scmp.ne.s32.totalorder %s122, %s124
      %p128 = scmp.eq.s32.totalorder %s25, 0
      %p129 = por %p127, %p128
      %p130 = scmp.ne.s32.totalorder %s122, %s124
      %p131 = scmp.eq.s32.totalorder %s30, 7
      %p132 = por %p130, %p131
      %p133 = scmp.ne.s32.totalorder %s124, %s125
      %p134 = scmp.eq.s32.totalorder %s30, 0
      %p135 = por %p133, %p134
      %p136 = scmp.ne.s32.totalorder %s124, %s125
      %p137 = scmp.eq.s32.totalorder %s31, 7
      %p138 = por %p136, %p137
      %p140 = scmp.ne.s32.totalorder %s125, %s139
      %p141 = scmp.eq.s32.totalorder %s31, 0
      %p142 = por %p140, %p141
      %s144 = sadd.s32 %s143, 1
      %p147 = scmp.eq.s32.totalorder %s25, 7
      %p148 = scmp.ne.s32.totalorder %s143, %s145
      %p149 = scmp.eq.s32.totalorder %s25, 0
      %p150 = por %p148, %p149
      %p151 = scmp.ne.s32.totalorder %s143, %s145
      %p152 = scmp.eq.s32.totalorder %s30, 7
      %p153 = por %p151, %p152
      %p154 = scmp.ne.s32.totalorder %s145, %s146
      %p155 = scmp.eq.s32.totalorder %s30, 0
      %p156 = por %p154, %p155
      %p157 = scmp.ne.s32.totalorder %s145, %s146
      %p158 = scmp.eq.s32.totalorder %s31, 7
      %p159 = por %p157, %p158
      %p161 = scmp.ne.s32.totalorder %s146, %s160
      %p162 = scmp.eq.s32.totalorder %s31, 0
      %p163 = por %p161, %p162
      %s165 = sadd.s32 %s164, 1
      %p168 = scmp.eq.s32.totalorder %s25, 7
      %p169 = scmp.ne.s32.totalorder %s164, %s166
      %p170 = scmp.eq.s32.totalorder %s25, 0
      %p171 = por %p169, %p170
      %p172 = scmp.ne.s32.totalorder %s164, %s166
      %p173 = scmp.eq.s32.totalorder %s30, 7
      %p174 = por %p172, %p173
      %p175 = scmp.ne.s32.totalorder %s166, %s167
      %p176 = scmp.eq.s32.totalorder %s30, 0
      %p177 = por %p175, %p176
      %p178 = scmp.ne.s32.totalorder %s166, %s167
      %p179 = scmp.eq.s32.totalorder %s31, 7
      %p180 = por %p178, %p179
      %p182 = scmp.ne.s32.totalorder %s167, %s181
      %p183 = scmp.eq.s32.totalorder %s31, 0
      %p184 = por %p182, %p183
      %s186 = sadd.s32 %s185, 1
      %p189 = scmp.eq.s32.totalorder %s25, 7
      %p190 = scmp.ne.s32.totalorder %s185, %s187
      %p191 = scmp.eq.s32.totalorder %s25, 0
      %p192 = por %p190, %p191
      %p193 = scmp.ne.s32.totalorder %s185, %s187
      %p194 = scmp.eq.s32.totalorder %s30, 7
      %p195 = por %p193, %p194
      %p196 = scmp.ne.s32.totalorder %s187, %s188
      %p197 = scmp.eq.s32.totalorder %s30, 0
      %p198 = por %p196, %p197
      %p199 = scmp.ne.s32.totalorder %s187, %s188
      %p200 = scmp.eq.s32.totalorder %s31, 7
      %p201 = por %p199, %p200
      %p203 = scmp.ne.s32.totalorder %s188, %s202
      %p204 = scmp.eq.s32.totalorder %s31, 0
      %p205 = por %p203, %p204
      %s206 = ssub.s32 %s25, %s32
      %p207 = scmp.eq.s32.totalorder %s206, 0
      %s209 = sadd.s32 %s208, 1
      %s210 = scalar_select %p207, %s208, %s209
      %p213 = pneg %p207
      %p214 = scmp.eq.s32.totalorder %s25, 7
      %p215 = por %p213, %p214
      %p216 = scmp.ne.s32.totalorder %s208, %s211
      %p217 = scmp.eq.s32.totalorder %s25, 0
      %p218 = por %p216, %p217
      %p219 = scmp.ne.s32.totalorder %s208, %s211
      %p220 = scmp.eq.s32.totalorder %s30, 7
      %p221 = por %p219, %p220
      %p222 = scmp.ne.s32.totalorder %s211, %s212
      %p223 = scmp.eq.s32.totalorder %s30, 0
      %p224 = por %p222, %p223
      %p225 = scmp.ne.s32.totalorder %s211, %s212
      %p226 = scmp.eq.s32.totalorder %s31, 7
      %p227 = por %p225, %p226
      %p229 = scmp.ne.s32.totalorder %s212, %s228
      %p230 = scmp.eq.s32.totalorder %s31, 0
      %p231 = por %p229, %p230
      %s233 = sadd.s32 %s232, 1
      %p236 = scmp.eq.s32.totalorder %s25, 7
      %p237 = scmp.ne.s32.totalorder %s232, %s234
      %p238 = scmp.eq.s32.totalorder %s25, 0
      %p239 = por %p237, %p238
      %p240 = scmp.ne.s32.totalorder %s232, %s234
      %p241 = scmp.eq.s32.totalorder %s30, 7
      %p242 = por %p240, %p241
      %p243 = scmp.ne.s32.totalorder %s234, %s235
      %p244 = scmp.eq.s32.totalorder %s30, 0
      %p245 = por %p243, %p244
      %p246 = scmp.ne.s32.totalorder %s234, %s235
      %p247 = scmp.eq.s32.totalorder %s31, 7
      %p248 = por %p246, %p247
      %p250 = scmp.ne.s32.totalorder %s235, %s249
      %p251 = scmp.eq.s32.totalorder %s31, 0
      %p252 = por %p250, %p251
      %p253 = scmp.le.s32.totalorder 1, %s25
      %p254 = scmp.lt.s32.totalorder %s25, 9
      %p255 = pnand %p253, %p254
      %p256 = pneg %p255
      // Predicated region
      $region9: #{tpu_custom_call.1} parent=5 // pred_check
        _
      $region10: #{tpu_custom_call.1} parent=5 // pred_check_branch
        %258 = sbr.rel (%p255) target = $region12
      $region11: #{tpu_custom_call.1} parent=5 // pred_region
        %s259 = ssub.s32 %s25, 1
        // Predicated region
        $region13: #{tpu_custom_call.1} parent=11 // pred_check
          %p260 = pneg %p72
        $region14: #{tpu_custom_call.1} parent=11 // pred_check_branch
          %262 = sbr.rel (%p260) target = $region16
        $region15: #{tpu_custom_call.1} parent=11 // pred_region
          _
        $region16: #{tpu_custom_call.1} parent=11 // pred_fallthru
          _
        // Predicated region
        $region17: #{tpu_custom_call.1} parent=11 // pred_check
          %p263 = pneg %p93
        $region18: #{tpu_custom_call.1} parent=11 // pred_check_branch
          %265 = sbr.rel (%p263) target = $region20
        $region19: #{tpu_custom_call.1} parent=11 // pred_region
          %s267 = ssub.s32 256, 256
          %268 = vsyncadd [#allocation7], %s267
          %s269 = sshll.u32 [#allocation6], 4
          %s270 = int_to_ptr.vmem [resolvable:$true] %s269
          %275 = dma.hbm_to_vmem [thread:$0]  %s2, 256, %s270, [#allocation7], 128, 128, 8
        $region20: #{tpu_custom_call.1} parent=11 // pred_fallthru
          _
        // Predicated region
        $region21: #{tpu_custom_call.1} parent=11 // pred_check
          %p276 = pneg %p114
        $region22: #{tpu_custom_call.1} parent=11 // pred_check_branch
          %278 = sbr.rel (%p276) target = $region24
        $region23: #{tpu_custom_call.1} parent=11 // pred_region
          %s280 = ssub.s32 2048, 2048
          %281 = vsyncadd [#allocation7], %s280
          %s282 = sshll.u32 [#allocation8], 4
          %s283 = int_to_ptr.vmem [resolvable:$true] %s282
          %288 = dma.hbm_to_vmem [thread:$0]  %s3, 2048, %s283, [#allocation7], 128, 128, 8
        $region24: #{tpu_custom_call.1} parent=11 // pred_fallthru
          _
        // Predicated region
        $region25: #{tpu_custom_call.1} parent=11 // pred_check
          %p289 = pneg %p135
        $region26: #{tpu_custom_call.1} parent=11 // pred_check_branch
          %291 = sbr.rel (%p289) target = $region28
        $region27: #{tpu_custom_call.1} parent=11 // pred_region
          %s293 = ssub.s32 16, 16
          %294 = vsyncadd [#allocation10], %s293
          %s296 = sshll.u32 [#allocation9], 4
          %s297 = int_to_ptr.vmem [resolvable:$true] %s296
          %299 = dma.hbm_to_vmem [thread:$0]  %s4, 16, %s297, [#allocation10]
        $region28: #{tpu_custom_call.1} parent=11 // pred_fallthru
          _
        // Predicated region
        $region29: #{tpu_custom_call.1} parent=11 // pred_check
          %p300 = pneg %p156
        $region30: #{tpu_custom_call.1} parent=11 // pred_check_branch
          %302 = sbr.rel (%p300) target = $region32
        $region31: #{tpu_custom_call.1} parent=11 // pred_region
          _
        $region32: #{tpu_custom_call.1} parent=11 // pred_fallthru
          _
        // Predicated region
        $region33: #{tpu_custom_call.1} parent=11 // pred_check
          %p303 = pneg %p177
        $region34: #{tpu_custom_call.1} parent=11 // pred_check_branch
          %305 = sbr.rel (%p303) target = $region36
        $region35: #{tpu_custom_call.1} parent=11 // pred_region
          %s307 = ssub.s32 2048, 2048
          %308 = vsyncadd [#allocation10], %s307
          %s309 = sshll.u32 [#allocation11], 4
          %s310 = int_to_ptr.vmem [resolvable:$true] %s309
          %315 = dma.hbm_to_vmem [thread:$0]  %s6, 2048, %s310, [#allocation10], 128, 128, 8
        $region36: #{tpu_custom_call.1} parent=11 // pred_fallthru
          _
        // Predicated region
        $region37: #{tpu_custom_call.1} parent=11 // pred_check
          %p316 = pneg %p198
        $region38: #{tpu_custom_call.1} parent=11 // pred_check_branch
          %318 = sbr.rel (%p316) target = $region40
        $region39: #{tpu_custom_call.1} parent=11 // pred_region
          _
        $region40: #{tpu_custom_call.1} parent=11 // pred_fallthru
          _
      $region12: #{tpu_custom_call.1} parent=5 // pred_fallthru
        _
      %p319 = scmp.lt.s32.totalorder %s25, 8
      // Predicated region
      $region41: #{tpu_custom_call.1} parent=5 // pred_check
        %p320 = pneg %p319
      $region42: #{tpu_custom_call.1} parent=5 // pred_check_branch
        %322 = sbr.rel (%p320) target = $region44
      $region43: #{tpu_custom_call.1} parent=5 // pred_region
        // Predicated region
        $region45: #{tpu_custom_call.1} parent=43 // pred_check
          %p323 = pneg %p45
        $region46: #{tpu_custom_call.1} parent=43 // pred_check_branch
          %325 = sbr.rel (%p323) target = $region48
        $region47: #{tpu_custom_call.1} parent=43 // pred_region
          %s326 = sand.u32 %s35, 1
          %s327 = scalar_lea.sflag [#allocation4], %s326
          %s328 = sand.u32 %s35, 1
          %s329 = smul.addr %s328, 2
          %s330 = scalar_lea.vmem [#allocation3], %s329
          %s332 = ssub.s32 32, 32
          %333 = vsyncadd %s327, %s332
          %s334 = smul.addr %s25, 32
          %s335 = scalar_lea.hbm %s0, %s334
          %s337 = sshll.u32 %s330, 4
          %s338 = int_to_ptr.vmem [resolvable:$true] %s337
          %340 = dma.hbm_to_vmem [thread:$0]  %s335, 32, %s338, %s327
        $region48: #{tpu_custom_call.1} parent=43 // pred_fallthru
          _
      $region44: #{tpu_custom_call.1} parent=5 // pred_fallthru
        _
      %p341 = scmp.le.s32.totalorder 1, %s25
      %p342 = scmp.lt.s32.totalorder %s25, 9
      %p343 = pnand %p341, %p342
      %p344 = pneg %p343
      // Predicated region
      $region49: #{tpu_custom_call.1} parent=5 // pred_check
        _
      $region50: #{tpu_custom_call.1} parent=5 // pred_check_branch
        %346 = sbr.rel (%p343) target = $region52
      $region51: #{tpu_custom_call.1} parent=5 // pred_region
        %s347 = ssub.s32 %s25, 1
        %s348 = sand.u32 %s38, 1
        %s349 = scalar_lea.sflag [#allocation4], %s348
        %s350 = sand.u32 %s38, 1
        %s351 = smul.addr %s350, 2
        %s352 = scalar_lea.vmem [#allocation3], %s351
        // Predicated region
        $region53: #{tpu_custom_call.1} parent=51 // pred_check
          %p353 = pneg %p51
        $region54: #{tpu_custom_call.1} parent=51 // pred_check_branch
          %355 = sbr.rel (%p353) target = $region56
        $region55: #{tpu_custom_call.1} parent=51 // pred_region
          %356 = dma.done %s349, 32
        $region56: #{tpu_custom_call.1} parent=51 // pred_fallthru
          _
        // Predicated region
        $region57: #{tpu_custom_call.1} parent=51 // pred_check
          %p357 = pneg %p93
        $region58: #{tpu_custom_call.1} parent=51 // pred_check_branch
          %359 = sbr.rel (%p357) target = $region60
        $region59: #{tpu_custom_call.1} parent=51 // pred_region
          %360 = dma.done [#allocation7], 256
        $region60: #{tpu_custom_call.1} parent=51 // pred_fallthru
          _
        // Predicated region
        $region61: #{tpu_custom_call.1} parent=51 // pred_check
          %p361 = pneg %p114
        $region62: #{tpu_custom_call.1} parent=51 // pred_check_branch
          %363 = sbr.rel (%p361) target = $region64
        $region63: #{tpu_custom_call.1} parent=51 // pred_region
          %364 = dma.done [#allocation7], 2048
        $region64: #{tpu_custom_call.1} parent=51 // pred_fallthru
          _
        // Predicated region
        $region65: #{tpu_custom_call.1} parent=51 // pred_check
          %p365 = pneg %p135
        $region66: #{tpu_custom_call.1} parent=51 // pred_check_branch
          %367 = sbr.rel (%p365) target = $region68
        $region67: #{tpu_custom_call.1} parent=51 // pred_region
          %368 = dma.done [#allocation10], 16
        $region68: #{tpu_custom_call.1} parent=51 // pred_fallthru
          _
        // Predicated region
        $region69: #{tpu_custom_call.1} parent=51 // pred_check
          %p369 = pneg %p177
        $region70: #{tpu_custom_call.1} parent=51 // pred_check_branch
          %371 = sbr.rel (%p369) target = $region72
        $region71: #{tpu_custom_call.1} parent=51 // pred_region
          %372 = dma.done [#allocation10], 2048
        $region72: #{tpu_custom_call.1} parent=51 // pred_fallthru
          _
        %s373 = sand.u32 %s38, 1
        %s374 = scalar_lea.sflag [#allocation4], %s373
        %s375 = sand.u32 %s38, 1
        %s376 = smul.addr %s375, 2
        %s377 = scalar_lea.vmem [#allocation3], %s376
        %p378 = pneg %p51
        %p379 = pneg %p48
        %p380 = pneg %p72
        %p381 = pneg %p69
        %p382 = pneg %p93
        %p383 = pneg %p90
        %p384 = pneg %p114
        %p385 = pneg %p111
        %p386 = pneg %p135
        %p387 = pneg %p132
        %p388 = pneg %p156
        %p389 = pneg %p153
        %p390 = pneg %p177
        %p391 = pneg %p174
        %p392 = pneg %p198
        %p393 = pneg %p195
        %p394 = pneg %p224
        %p395 = pneg %p221
        %s396 = sand.u32 %s211, 1
        %s397 = scalar_lea.sflag [#allocation5], %s396
        %s398 = sand.u32 %s211, 1
        %s399 = smul.addr %s398, 2
        %s400 = scalar_lea.vmem [#allocation12], %s399
        %p401 = pneg %p245
        %p402 = pneg %p242
        %p403 = scmp.eq.s32.totalorder %s30, 0
        // Predicated region
        $region73: #{tpu_custom_call.1} parent=51 // pred_check
          %p404 = pneg %p403
        $region74: #{tpu_custom_call.1} parent=51 // pred_check_branch
          %406 = sbr.rel (%p404) target = $region76
        $region75: #{tpu_custom_call.1} parent=51 // pred_region
          %v407 = vld [vmem:[%s1] sm:$0x3]
          %408 = vst [vmem:[#allocation2] sm:$0x3] %v407
        $region76: #{tpu_custom_call.1} parent=51 // pred_fallthru
          _
        %v409 = vld [vmem:[%s352] sm:$0x3]
        %v410 = vld [vmem:[#allocation2] sm:$0x3]
        %v411 = vld [vmem:[%s5] sm:$0xff]
        %v412 = vld [vmem:[%s5 + $0x8] sm:$0xff]
        %v413 = vld [vmem:[#allocation11] sm:$0xff]
        %v414 = vld [vmem:[#allocation11 + $0x8] sm:$0xff]
        %v415 = vld [vmem:[#allocation11 + $0x10] sm:$0xff]
        %v416 = vld [vmem:[#allocation11 + $0x18] sm:$0xff]
        %v417 = vld [vmem:[#allocation11 + $0x20] sm:$0xff]
        %v418 = vld [vmem:[#allocation11 + $0x28] sm:$0xff]
        %v419 = vld [vmem:[#allocation11 + $0x30] sm:$0xff]
        %v420 = vld [vmem:[#allocation11 + $0x38] sm:$0xff]
        %v421 = vld [vmem:[#allocation11 + $0x40] sm:$0xff]
        %v422 = vld [vmem:[#allocation11 + $0x48] sm:$0xff]
        %v423 = vld [vmem:[#allocation11 + $0x50] sm:$0xff]
        %v424 = vld [vmem:[#allocation11 + $0x58] sm:$0xff]
        %v425 = vld [vmem:[#allocation11 + $0x60] sm:$0xff]
        %v426 = vld [vmem:[#allocation11 + $0x68] sm:$0xff]
        %v427 = vld [vmem:[#allocation11 + $0x70] sm:$0xff]
        %v428 = vld [vmem:[#allocation11 + $0x78] sm:$0xff]
        %429 = vmatprep.subr.mxu0 0.0
        %430 = vmatpush1.msra.mxu0 %v413
        %431 = vmatprep.subr.mxu0 0.0
        %432 = vmatpush1.msra.mxu0 %v414
        %433 = vmatprep.subr.mxu0 0.0
        %434 = vmatpush1.msra.mxu0 %v415
        %435 = vmatprep.subr.mxu0 0.0
        %436 = vmatpush1.msra.mxu0 %v416
        %437 = vmatprep.subr.mxu0 0.0
        %438 = vmatpush1.msra.mxu0 %v417
        %439 = vmatprep.subr.mxu0 0.0
        %440 = vmatpush1.msra.mxu0 %v418
        %441 = vmatprep.subr.mxu0 0.0
        %442 = vmatpush1.msra.mxu0 %v419
        %443 = vmatprep.subr.mxu0 0.0
        %444 = vmatpush1.msra.mxu0 %v420
        %445 = vmatprep.subr.mxu0 0.0
        %446 = vmatpush1.msra.mxu0 %v421
        %447 = vmatprep.subr.mxu0 0.0
        %448 = vmatpush1.msra.mxu0 %v422
        %449 = vmatprep.subr.mxu0 0.0
        %450 = vmatpush1.msra.mxu0 %v423
        %451 = vmatprep.subr.mxu0 0.0
        %452 = vmatpush1.msra.mxu0 %v424
        %453 = vmatprep.subr.mxu0 0.0
        %454 = vmatpush1.msra.mxu0 %v425
        %455 = vmatprep.subr.mxu0 0.0
        %456 = vmatpush1.msra.mxu0 %v426
        %457 = vmatprep.subr.mxu0 0.0
        %458 = vmatpush1.msra.mxu0 %v427
        %459 = vmatprep.subr.mxu0 0.0
        %460 = vmatpush1.msra.mxu0 %v428
        %461 = vmatprep.subr.mxu0 0.0
        %462 = vmatpush1.msra.mxu0 0.0
        %463 = vmatprep.subr.mxu0 0.0
        %464 = vmatpush1.msra.mxu0 0.0
        %465 = vmatprep.subr.mxu0 0.0
        %466 = vmatpush1.msra.mxu0 0.0
        %467 = vmatprep.subr.mxu0 0.0
        %468 = vmatpush1.msra.mxu0 0.0
        %469 = vmatprep.subr.mxu0 0.0
        %470 = vmatpush1.msra.mxu0 0.0
        %471 = vmatprep.subr.mxu0 0.0
        %472 = vmatpush1.msra.mxu0 0.0
        %473 = vmatprep.subr.mxu0 0.0
        %474 = vmatpush1.msra.mxu0 0.0
        %475 = vmatprep.subr.mxu0 0.0
        %476 = vmatpush1.msra.mxu0 0.0
        %477 = vmatprep.subr.mxu0 0.0
        %478 = vmatpush1.msra.mxu0 0.0
        %479 = vmatprep.subr.mxu0 0.0
        %480 = vmatpush1.msra.mxu0 0.0
        %481 = vmatprep.subr.mxu0 0.0
        %482 = vmatpush1.msra.mxu0 0.0
        %483 = vmatprep.subr.mxu0 0.0
        %484 = vmatpush1.msra.mxu0 0.0
        %485 = vmatprep.subr.mxu0 0.0
        %486 = vmatpush1.msra.mxu0 0.0
        %487 = vmatprep.subr.mxu0 0.0
        %488 = vmatpush1.msra.mxu0 0.0
        %489 = vmatprep.subr.mxu0 0.0
        %490 = vmatpush1.msra.mxu0 0.0
        %491 = vmatprep.subr.mxu0 0.0
        %492 = vmatpush1.msra.mxu0 0.0
        %493 = vmatprep.mubr.f32.mxu0 0.0
        %494 = vmatmul.mubr.f32.gmra.mrb[0].mxu0 %v410
        %v495 = vpop.f32.mrb[0].mxu0
        %v496 = vadd.f32 0.0, %v495
        %v497 = vpop.f32.mrb[0].mxu0
        %498 = vdwg.mxu0
        %vm499 = vcmask 130048
        %v501 = vsel %vm499, %v409, 0
        %503 = vmatprep.subr.mxu0 0.0
        %504 = vmatpush1.msra.mxu0 %v411
        %505 = vmatprep.subr.mxu0 0.0
        %506 = vmatpush1.msra.mxu0 %v412
        %507 = vmatprep.subr.mxu0 0.0
        %508 = vmatpush1.msra.mxu0 0.0
        %509 = vmatprep.subr.mxu0 0.0
        %510 = vmatpush1.msra.mxu0 0.0
        %511 = vmatprep.subr.mxu0 0.0
        %512 = vmatpush1.msra.mxu0 0.0
        %513 = vmatprep.subr.mxu0 0.0
        %514 = vmatpush1.msra.mxu0 0.0
        %515 = vmatprep.subr.mxu0 0.0
        %516 = vmatpush1.msra.mxu0 0.0
        %517 = vmatprep.subr.mxu0 0.0
        %518 = vmatpush1.msra.mxu0 0.0
        %519 = vmatprep.subr.mxu0 0.0
        %520 = vmatpush1.msra.mxu0 0.0
        %521 = vmatprep.subr.mxu0 0.0
        %522 = vmatpush1.msra.mxu0 0.0
        %523 = vmatprep.subr.mxu0 0.0
        %524 = vmatpush1.msra.mxu0 0.0
        %525 = vmatprep.subr.mxu0 0.0
        %526 = vmatpush1.msra.mxu0 0.0
        %527 = vmatprep.subr.mxu0 0.0
        %528 = vmatpush1.msra.mxu0 0.0
        %529 = vmatprep.subr.mxu0 0.0
        %530 = vmatpush1.msra.mxu0 0.0
        %531 = vmatprep.subr.mxu0 0.0
        %532 = vmatpush1.msra.mxu0 0.0
        %533 = vmatprep.subr.mxu0 0.0
        %534 = vmatpush1.msra.mxu0 0.0
        %535 = vmatprep.subr.mxu0 0.0
        %536 = vmatpush1.msra.mxu0 0.0
        %537 = vmatprep.subr.mxu0 0.0
        %538 = vmatpush1.msra.mxu0 0.0
        %539 = vmatprep.subr.mxu0 0.0
        %540 = vmatpush1.msra.mxu0 0.0
        %541 = vmatprep.subr.mxu0 0.0
        %542 = vmatpush1.msra.mxu0 0.0
        %543 = vmatprep.subr.mxu0 0.0
        %544 = vmatpush1.msra.mxu0 0.0
        %545 = vmatprep.subr.mxu0 0.0
        %546 = vmatpush1.msra.mxu0 0.0
        %547 = vmatprep.subr.mxu0 0.0
        %548 = vmatpush1.msra.mxu0 0.0
        %549 = vmatprep.subr.mxu0 0.0
        %550 = vmatpush1.msra.mxu0 0.0
        %551 = vmatprep.subr.mxu0 0.0
        %552 = vmatpush1.msra.mxu0 0.0
        %553 = vmatprep.subr.mxu0 0.0
        %554 = vmatpush1.msra.mxu0 0.0
        %555 = vmatprep.subr.mxu0 0.0
        %556 = vmatpush1.msra.mxu0 0.0
        %557 = vmatprep.subr.mxu0 0.0
        %558 = vmatpush1.msra.mxu0 0.0
        %559 = vmatprep.subr.mxu0 0.0
        %560 = vmatpush1.msra.mxu0 0.0
        %561 = vmatprep.subr.mxu0 0.0
        %562 = vmatpush1.msra.mxu0 0.0
        %563 = vmatprep.subr.mxu0 0.0
        %564 = vmatpush1.msra.mxu0 0.0
        %565 = vmatprep.subr.mxu0 0.0
        %566 = vmatpush1.msra.mxu0 0.0
        %567 = vmatprep.mubr.f32.mxu0 0.0
        %568 = vmatmul.mubr.f32.gmra.mrb[0].mxu0 %v501
        %v569 = vpop.f32.mrb[0].mxu0
        %v570 = vadd.f32 %v496, %v569
        %v571 = vpop.f32.mrb[0].mxu0
        %572 = vdwg.mxu0
        %v573 = vld [vmem:[%s7] sm:$0x1]
        %v575 = vlaneseq
        %v576 = vshrl.u32 %v575, 7
        %v577 = vsub.s32 0, %v576
        %v578 = vrot.slane %v573, %v577
        %v580 = vadd.f32 %v570, %v578
        %vm581 = vcmask 1041408
        %v582 = vsel %vm581, %v580, -inf
        %583 = vmax.xlane.f32.xlu0 %v582
        %v584 = vpop.xlane.xlu0 %583
        %v585 = vsub.f32 %v580, %v584
        %v586 = vmul.f32 %v585, 1.442695
        %v587 = vpow.pop %v586
        %v588 = vsel %vm581, %v587, 0.0
        %589 = vadd.xlane.f32.xlu0 %v588
        %v590 = vpop.xlane.xlu0 %589
        %v591 = vlog2.pop %v590
        %v592 = vmul.f32 %v591, 0.6931472
        %v593 = vsub.f32 %v585, %v592
        %594 = vst [vmem:[%s400] sm:$0x3] %v593
        %v595 = vld [vmem:[#allocation6] sm:$0xff]
        %v596 = vld [vmem:[#allocation6 + $0x8] sm:$0xff]
        %v597 = vld [vmem:[#allocation8] sm:$0xff]
        %v598 = vld [vmem:[#allocation8 + $0x8] sm:$0xff]
        %v599 = vld [vmem:[#allocation8 + $0x10] sm:$0xff]
        %v600 = vld [vmem:[#allocation8 + $0x18] sm:$0xff]
        %v601 = vld [vmem:[#allocation8 + $0x20] sm:$0xff]
        %v602 = vld [vmem:[#allocation8 + $0x28] sm:$0xff]
        %v603 = vld [vmem:[#allocation8 + $0x30] sm:$0xff]
        %v604 = vld [vmem:[#allocation8 + $0x38] sm:$0xff]
        %v605 = vld [vmem:[#allocation8 + $0x40] sm:$0xff]
        %v606 = vld [vmem:[#allocation8 + $0x48] sm:$0xff]
        %v607 = vld [vmem:[#allocation8 + $0x50] sm:$0xff]
        %v608 = vld [vmem:[#allocation8 + $0x58] sm:$0xff]
        %v609 = vld [vmem:[#allocation8 + $0x60] sm:$0xff]
        %v610 = vld [vmem:[#allocation8 + $0x68] sm:$0xff]
        %v611 = vld [vmem:[#allocation8 + $0x70] sm:$0xff]
        %v612 = vld [vmem:[#allocation8 + $0x78] sm:$0xff]
        %613 = vmatprep.subr.mxu0 0.0
        %614 = vmatpush1.msra.mxu0 %v597
        %615 = vmatprep.subr.mxu0 0.0
        %616 = vmatpush1.msra.mxu0 %v598
        %617 = vmatprep.subr.mxu0 0.0
        %618 = vmatpush1.msra.mxu0 %v599
        %619 = vmatprep.subr.mxu0 0.0
        %620 = vmatpush1.msra.mxu0 %v600
        %621 = vmatprep.subr.mxu0 0.0
        %622 = vmatpush1.msra.mxu0 %v601
        %623 = vmatprep.subr.mxu0 0.0
        %624 = vmatpush1.msra.mxu0 %v602
        %625 = vmatprep.subr.mxu0 0.0
        %626 = vmatpush1.msra.mxu0 %v603
        %627 = vmatprep.subr.mxu0 0.0
        %628 = vmatpush1.msra.mxu0 %v604
        %629 = vmatprep.subr.mxu0 0.0
        %630 = vmatpush1.msra.mxu0 %v605
        %631 = vmatprep.subr.mxu0 0.0
        %632 = vmatpush1.msra.mxu0 %v606
        %633 = vmatprep.subr.mxu0 0.0
        %634 = vmatpush1.msra.mxu0 %v607
        %635 = vmatprep.subr.mxu0 0.0
        %636 = vmatpush1.msra.mxu0 %v608
        %637 = vmatprep.subr.mxu0 0.0
        %638 = vmatpush1.msra.mxu0 %v609
        %639 = vmatprep.subr.mxu0 0.0
        %640 = vmatpush1.msra.mxu0 %v610
        %641 = vmatprep.subr.mxu0 0.0
        %642 = vmatpush1.msra.mxu0 %v611
        %643 = vmatprep.subr.mxu0 0.0
        %644 = vmatpush1.msra.mxu0 %v612
        %645 = vmatprep.subr.mxu0 0.0
        %646 = vmatpush1.msra.mxu0 0.0
        %647 = vmatprep.subr.mxu0 0.0
        %648 = vmatpush1.msra.mxu0 0.0
        %649 = vmatprep.subr.mxu0 0.0
        %650 = vmatpush1.msra.mxu0 0.0
        %651 = vmatprep.subr.mxu0 0.0
        %652 = vmatpush1.msra.mxu0 0.0
        %653 = vmatprep.subr.mxu0 0.0
        %654 = vmatpush1.msra.mxu0 0.0
        %655 = vmatprep.subr.mxu0 0.0
        %656 = vmatpush1.msra.mxu0 0.0
        %657 = vmatprep.subr.mxu0 0.0
        %658 = vmatpush1.msra.mxu0 0.0
        %659 = vmatprep.subr.mxu0 0.0
        %660 = vmatpush1.msra.mxu0 0.0
        %661 = vmatprep.subr.mxu0 0.0
        %662 = vmatpush1.msra.mxu0 0.0
        %663 = vmatprep.subr.mxu0 0.0
        %664 = vmatpush1.msra.mxu0 0.0
        %665 = vmatprep.subr.mxu0 0.0
        %666 = vmatpush1.msra.mxu0 0.0
        %667 = vmatprep.subr.mxu0 0.0
        %668 = vmatpush1.msra.mxu0 0.0
        %669 = vmatprep.subr.mxu0 0.0
        %670 = vmatpush1.msra.mxu0 0.0
        %671 = vmatprep.subr.mxu0 0.0
        %672 = vmatpush1.msra.mxu0 0.0
        %673 = vmatprep.subr.mxu0 0.0
        %674 = vmatpush1.msra.mxu0 0.0
        %675 = vmatprep.subr.mxu0 0.0
        %676 = vmatpush1.msra.mxu0 0.0
        %677 = vmatprep.mubr.f32.mxu0 0.0
        %678 = vmatmul.mubr.f32.gmra.mrb[0].mxu0 %v410
        %v679 = vpop.f32.mrb[0].mxu0
        %v680 = vadd.f32 0.0, %v679
        %v681 = vpop.f32.mrb[0].mxu0
        %682 = vdwg.mxu0
        %683 = vmatprep.subr.mxu0 0.0
        %684 = vmatpush1.msra.mxu0 %v595
        %685 = vmatprep.subr.mxu0 0.0
        %686 = vmatpush1.msra.mxu0 %v596
        %687 = vmatprep.subr.mxu0 0.0
        %688 = vmatpush1.msra.mxu0 0.0
        %689 = vmatprep.subr.mxu0 0.0
        %690 = vmatpush1.msra.mxu0 0.0
        %691 = vmatprep.subr.mxu0 0.0
        %692 = vmatpush1.msra.mxu0 0.0
        %693 = vmatprep.subr.mxu0 0.0
        %694 = vmatpush1.msra.mxu0 0.0
        %695 = vmatprep.subr.mxu0 0.0
        %696 = vmatpush1.msra.mxu0 0.0
        %697 = vmatprep.subr.mxu0 0.0
        %698 = vmatpush1.msra.mxu0 0.0
        %699 = vmatprep.subr.mxu0 0.0
        %700 = vmatpush1.msra.mxu0 0.0
        %701 = vmatprep.subr.mxu0 0.0
        %702 = vmatpush1.msra.mxu0 0.0
        %703 = vmatprep.subr.mxu0 0.0
        %704 = vmatpush1.msra.mxu0 0.0
        %705 = vmatprep.subr.mxu0 0.0
        %706 = vmatpush1.msra.mxu0 0.0
        %707 = vmatprep.subr.mxu0 0.0
        %708 = vmatpush1.msra.mxu0 0.0
        %709 = vmatprep.subr.mxu0 0.0
        %710 = vmatpush1.msra.mxu0 0.0
        %711 = vmatprep.subr.mxu0 0.0
        %712 = vmatpush1.msra.mxu0 0.0
        %713 = vmatprep.subr.mxu0 0.0
        %714 = vmatpush1.msra.mxu0 0.0
        %715 = vmatprep.subr.mxu0 0.0
        %716 = vmatpush1.msra.mxu0 0.0
        %717 = vmatprep.subr.mxu0 0.0
        %718 = vmatpush1.msra.mxu0 0.0
        %719 = vmatprep.subr.mxu0 0.0
        %720 = vmatpush1.msra.mxu0 0.0
        %721 = vmatprep.subr.mxu0 0.0
        %722 = vmatpush1.msra.mxu0 0.0
        %723 = vmatprep.subr.mxu0 0.0
        %724 = vmatpush1.msra.mxu0 0.0
        %725 = vmatprep.subr.mxu0 0.0
        %726 = vmatpush1.msra.mxu0 0.0
        %727 = vmatprep.subr.mxu0 0.0
        %728 = vmatpush1.msra.mxu0 0.0
        %729 = vmatprep.subr.mxu0 0.0
        %730 = vmatpush1.msra.mxu0 0.0
        %731 = vmatprep.subr.mxu0 0.0
        %732 = vmatpush1.msra.mxu0 0.0
        %733 = vmatprep.subr.mxu0 0.0
        %734 = vmatpush1.msra.mxu0 0.0
        %735 = vmatprep.subr.mxu0 0.0
        %736 = vmatpush1.msra.mxu0 0.0
        %737 = vmatprep.subr.mxu0 0.0
        %738 = vmatpush1.msra.mxu0 0.0
        %739 = vmatprep.subr.mxu0 0.0
        %740 = vmatpush1.msra.mxu0 0.0
        %741 = vmatprep.subr.mxu0 0.0
        %742 = vmatpush1.msra.mxu0 0.0
        %743 = vmatprep.subr.mxu0 0.0
        %744 = vmatpush1.msra.mxu0 0.0
        %745 = vmatprep.subr.mxu0 0.0
        %746 = vmatpush1.msra.mxu0 0.0
        %747 = vmatprep.mubr.f32.mxu0 0.0
        %748 = vmatmul.mubr.f32.gmra.mrb[0].mxu0 %v501
        %v749 = vpop.f32.mrb[0].mxu0
        %v750 = vadd.f32 %v680, %v749
        %v751 = vpop.f32.mrb[0].mxu0
        %752 = vdwg.mxu0
        %v753 = vld [vmem:[#allocation9] sm:$0x1]
        %v755 = vlaneseq
        %v756 = vshrl.u32 %v755, 7
        %v757 = vsub.s32 0, %v756
        %v758 = vrot.slane %v753, %v757
        %v760 = vadd.f32 %v750, %v758
        %761 = vst [vmem:[#allocation2] sm:$0x3] %v760
        %p762 = scmp.eq.s32.totalorder %s30, 7
        // Predicated region
        $region77: #{tpu_custom_call.1} parent=51 // pred_check
          %p763 = pneg %p762
        $region78: #{tpu_custom_call.1} parent=51 // pred_check_branch
          %765 = sbr.rel (%p763) target = $region80
        $region79: #{tpu_custom_call.1} parent=51 // pred_region
          %766 = vst [vmem:[#allocation13] sm:$0x3] %v760
        $region80: #{tpu_custom_call.1} parent=51 // pred_fallthru
          _
        %s767 = sand.u32 %s211, 1
        %s768 = scalar_lea.sflag [#allocation5], %s767
        %s769 = sand.u32 %s211, 1
        %s770 = smul.addr %s769, 2
        %s771 = scalar_lea.vmem [#allocation12], %s770
        // Predicated region
        $region81: #{tpu_custom_call.1} parent=51 // pred_check
          %p772 = pneg %p221
        $region82: #{tpu_custom_call.1} parent=51 // pred_check_branch
          %774 = sbr.rel (%p772) target = $region84
        $region83: #{tpu_custom_call.1} parent=51 // pred_region
          %s776 = ssub.s32 32, 32
          %777 = vsyncadd %s768, %s776
          %s778 = smul.addr %s30, 32
          %s779 = scalar_lea.hbm %s8, %s778
          %s781 = sshll.u32 %s771, 4
          %s782 = int_to_ptr.vmem [resolvable:$true] %s781
          %784 = dma.vmem_to_hbm [thread:$0]  %s782, 32, %s779, %s768
        $region84: #{tpu_custom_call.1} parent=51 // pred_fallthru
          _
        // Predicated region
        $region85: #{tpu_custom_call.1} parent=51 // pred_check
          %p785 = pneg %p242
        $region86: #{tpu_custom_call.1} parent=51 // pred_check_branch
          %787 = sbr.rel (%p785) target = $region88
        $region87: #{tpu_custom_call.1} parent=51 // pred_region
          %s789 = ssub.s32 32, 32
          %790 = vsyncadd [#allocation14], %s789
          %s792 = sshll.u32 [#allocation13], 4
          %s793 = int_to_ptr.vmem [resolvable:$true] %s792
          %795 = dma.vmem_to_hbm [thread:$0]  %s793, 32, %s9, [#allocation14]
        $region88: #{tpu_custom_call.1} parent=51 // pred_fallthru
          _
        // Predicated region
        $region89: #{tpu_custom_call.1} parent=51 // pred_check
          %p796 = pneg %p242
        $region90: #{tpu_custom_call.1} parent=51 // pred_check_branch
          %798 = sbr.rel (%p796) target = $region92
        $region91: #{tpu_custom_call.1} parent=51 // pred_region
          %799 = dma.done [#allocation14], 32
        $region92: #{tpu_custom_call.1} parent=51 // pred_fallthru
          _
      $region52: #{tpu_custom_call.1} parent=5 // pred_fallthru
        _
      %p800 = scmp.le.s32.totalorder 2, %s25
      // Predicated region
      $region93: #{tpu_custom_call.1} parent=5 // pred_check
        %p801 = pneg %p800
      $region94: #{tpu_custom_call.1} parent=5 // pred_check_branch
        %803 = sbr.rel (%p801) target = $region96
      $region95: #{tpu_custom_call.1} parent=5 // pred_region
        %s804 = ssub.s32 %s25, 2
        // Predicated region
        $region97: #{tpu_custom_call.1} parent=95 // pred_check
          %p805 = pneg %p227
        $region98: #{tpu_custom_call.1} parent=95 // pred_check_branch
          %807 = sbr.rel (%p805) target = $region100
        $region99: #{tpu_custom_call.1} parent=95 // pred_region
          %s808 = sand.u32 %s212, 1
          %s809 = scalar_lea.sflag [#allocation5], %s808
          %s810 = sand.u32 %s212, 1
          %s811 = smul.addr %s810, 2
          %s812 = scalar_lea.vmem [#allocation12], %s811
          %813 = dma.done %s809, 32
        $region100: #{tpu_custom_call.1} parent=95 // pred_fallthru
          _
      $region96: #{tpu_custom_call.1} parent=5 // pred_fallthru
        _
    $region6: #{tpu_custom_call.1} parent=1 // loop_footer
      %s29 = sadd.s32 1, %s25
    $region7: #{tpu_custom_call.1} parent=1 // loop_footer_branch
      %24 = sbr.rel target = $region3
    $region8: #{tpu_custom_call.1} parent=1 // loop_exit
      _
    %814 = vsyncpa [#allocation4], 1
    %s815 = scalar_lea.sflag [#allocation4], 1
    %816 = vsyncpa %s815, 1
    %817 = vsyncpa [#allocation7], 1
    %818 = vsyncpa [#allocation10], 1
    %819 = vsyncpa [#allocation5], 1
    %s820 = scalar_lea.sflag [#allocation5], 1
    %821 = vsyncpa %s820, 1
    %822 = vsyncpa [#allocation14], 1

</llo_original>
